<compile_context>
chip_gen: v5e
topology: v5e:2x2
jax: 0.10.0
libtpu: 0.0.40
codegen_flags: <defaults>
</compile_context>

<pallas_src>
import functools

import jax
import jax.numpy as jnp
from jax.experimental import pallas as pl
from jax.experimental.pallas import tpu as pltpu

LN_EPS = 1e-5  # torch.nn.LayerNorm default


def _round_up(x, m):
    return ((x + m - 1) // m) * m


# ---------------------------------------------------------------------------
# Fused kernel: grid = (batch_tiles, n_layers), layer axis innermost.
# ---------------------------------------------------------------------------
def _mlp_fused_kernel(x_ref, w_ref, p_ref, o_ref, act_ref, *,
                      h_real, hp, use_relu):
    # x_ref  : (tm, Kp)   padded input rows          (matmul dtype)
    # w_ref  : (Kp, Hp)   this layer's padded weight (matmul dtype)
    # p_ref  : (3, Hp)    packed [bias; gamma; beta] for this layer (f32)
    # o_ref  : (tm, Hp)   output tile (only written on the last layer step)
    # act_ref: (tm, Kp)   VMEM-resident activation carried across layer steps
    l = pl.program_id(1)

    @pl.when(l == 0)
    def _():
        act_ref[...] = x_ref[...]

    # Linear on the MXU with f32 accumulation, then bias.
    h = jnp.dot(act_ref[...], w_ref[...], preferred_element_type=jnp.float32)
    h = h + p_ref[0:1, :]

    # Activation (f32 on the VPU/EUP).
    a = jnp.maximum(h, 0.0) if use_relu else jnp.tanh(h)

    # LayerNorm over the real hidden width. Padded columns of `a` are exact
    # zeros (zero weight columns + zero bias), so sums over Hp equal sums
    # over h_real; only the centered term needs masking when Hp > h_real.
    inv_h = 1.0 / float(h_real)
    mean = jnp.sum(a, axis=-1, keepdims=True) * inv_h
    centered = a - mean
    if hp != h_real:
        mask = jax.lax.broadcasted_iota(jnp.int32, a.shape, 1) < h_real
        centered = jnp.where(mask, centered, 0.0)
    var = jnp.sum(centered * centered, axis=-1, keepdims=True) * inv_h
    y = centered * jax.lax.rsqrt(var + LN_EPS)
    y = y * p_ref[1:2, :] + p_ref[2:3, :]     # gamma, beta (padded cols -> 0)

    # Keep the activation resident in VMEM for the next layer step.
    act_ref[:, :hp] = y.astype(act_ref.dtype)

    @pl.when(l == pl.num_programs(1) - 1)
    def _():
        o_ref[...] = y.astype(o_ref.dtype)


def _choose_m_tiling(m):
    # Large row tiles fill the MXU and amortize the ~0.35us/grid-step cost.
    # Keep >=2 tiles once the batch is large enough so both v7x TensorCores
    # get work on the "parallel" axis; tiny batches run as a single block.
    if m <= 256:
        tm = max(_round_up(m, 8), 8)
        return tm, tm
    tm = 256
    return tm, _round_up(m, tm)


def mlp_forward(x, w_stack, p_stack, *, h_real, use_relu):
    """Fused forward: x (M, K) f32 -> (M, h_real) f32."""
    M, K = x.shape
    L, Kp, Hp = w_stack.shape
    mm_dtype = w_stack.dtype

    tm, Mp = _choose_m_tiling(M)
    xp = jnp.zeros((Mp, Kp), mm_dtype).at[:M, :K].set(x.astype(mm_dtype))

    kernel = functools.partial(_mlp_fused_kernel, h_real=h_real, hp=Hp,
                               use_relu=use_relu)

    # Rough VMEM budget: double-buffered blocks + resident activation scratch.
    isz = jnp.dtype(mm_dtype).itemsize
    est = (2 * (tm * Kp * isz + Kp * Hp * isz + 8 * Hp * 4 + tm * Hp * 4)
           + tm * Kp * isz)
    # TODO(synk): very large hidden sizes on v7x (64 MiB VMEM) need an
    # H-tiled matmul with a LayerNorm epilogue instead of a bigger limit.
    vmem_limit = int(min(max(2 * est, 32 * 1024 * 1024), 100 * 1024 * 1024))

    out = pl.pallas_call(
        kernel,
        out_shape=jax.ShapeDtypeStruct((Mp, Hp), jnp.float32),
        grid_spec=pltpu.PrefetchScalarGridSpec(
            num_scalar_prefetch=0,
            grid=(Mp // tm, L),
            in_specs=[
                pl.BlockSpec((tm, Kp), lambda i, l: (i, 0)),           # x tile
                pl.BlockSpec((None, Kp, Hp), lambda i, l: (l, 0, 0)),  # layer W
                pl.BlockSpec((None, 3, Hp), lambda i, l: (l, 0, 0)),   # [b;g;beta]
            ],
            out_specs=pl.BlockSpec((tm, Hp), lambda i, l: (i, 0)),
            scratch_shapes=[pltpu.VMEM((tm, Kp), mm_dtype)],
        ),
        compiler_params=pltpu.CompilerParams(
            dimension_semantics=("parallel", "arbitrary"),
            vmem_limit_bytes=vmem_limit),
    )(xp, w_stack, p_stack)

    return out[:M, :h_real]


# ---------------------------------------------------------------------------
# Parameter initialization (deterministic, mirrors orthogonal init with gain)
# ---------------------------------------------------------------------------
def _orthogonal(key, in_dim, out_dim, gain):
    a = jax.random.normal(key, (max(in_dim, out_dim), min(in_dim, out_dim)),
                          dtype=jnp.float32)
    q, r = jnp.linalg.qr(a)
    q = q * jnp.sign(jnp.diag(r))
    if in_dim < out_dim:
        q = q.T
    return gain * q[:in_dim, :out_dim]


def make_mlp_params(key, input_dim, hidden_size, layer_N, use_ReLU, use_orthogonal):
    gain = jnp.sqrt(2.0) if use_ReLU else 5.0 / 3.0   # relu / tanh gains
    params = []
    dims_in = [input_dim] + [hidden_size] * layer_N
    for din in dims_in:
        key, wk = jax.random.split(key)
        if use_orthogonal:
            w = _orthogonal(wk, din, hidden_size, gain)
        else:  # xavier_uniform
            lim = gain * jnp.sqrt(6.0 / (din + hidden_size))
            w = jax.random.uniform(wk, (din, hidden_size), jnp.float32, -lim, lim)
        params.append({
            "w": w,                                          # (in, out)
            "b": jnp.zeros((hidden_size,), jnp.float32),     # Linear bias = 0
            "gamma": jnp.ones((hidden_size,), jnp.float32),  # LayerNorm weight
            "beta": jnp.zeros((hidden_size,), jnp.float32),  # LayerNorm bias
        })
    return params


class MLPLayerPallas:
    """JAX/Pallas equivalent of the PyTorch MLPLayer module (fused forward)."""

    def __init__(self, input_dim, hidden_size, layer_N, use_orthogonal, use_ReLU,
                 key=None, matmul_dtype=jnp.bfloat16):
        if key is None:
            key = jax.random.PRNGKey(0)
        self.input_dim = int(input_dim)
        self.hidden_size = int(hidden_size)
        self.layer_N = int(layer_N)
        self.use_ReLU = bool(use_ReLU)
        self.matmul_dtype = matmul_dtype
        self.params = make_mlp_params(key, input_dim, hidden_size, layer_N,
                                      use_ReLU, use_orthogonal)

        # Stack layers and zero-pad feature dims to multiples of 128.
        H = self.hidden_size
        Hp = _round_up(H, 128)
        Kp = max(_round_up(self.input_dim, 128), Hp)
        L = self.layer_N + 1
        w = jnp.zeros((L, Kp, Hp), jnp.float32)
        p = jnp.zeros((L, 3, Hp), jnp.float32)
        for li, prm in enumerate(self.params):
            k_in = prm["w"].shape[0]
            w = w.at[li, :k_in, :H].set(prm["w"])
            p = p.at[li, 0, :H].set(prm["b"])
            p = p.at[li, 1, :H].set(prm["gamma"])
            p = p.at[li, 2, :H].set(prm["beta"])
        self.w_stack = w.astype(matmul_dtype)   # bf16 weights: half the DMA, 2x MXU
        self.p_stack = p                        # bias / LN affine stay f32

    def __call__(self, x):
        return mlp_forward(x, self.w_stack, self.p_stack,
                           h_real=self.hidden_size, use_relu=self.use_ReLU)


# ---------------------------------------------------------------------------
# Pure-JAX reference (same matmul dtype policy) for sanity checking
# ---------------------------------------------------------------------------
def _ref_forward(params, x, use_relu, matmul_dtype):
    for p in params:
        h = jnp.dot(x.astype(matmul_dtype), p["w"].astype(matmul_dtype),
                    preferred_element_type=jnp.float32) + p["b"]
        a = jnp.maximum(h, 0.0) if use_relu else jnp.tanh(h)
        mean = jnp.mean(a, axis=-1, keepdims=True)
        var = jnp.mean((a - mean) ** 2, axis=-1, keepdims=True)
        x = (a - mean) * jax.lax.rsqrt(var + LN_EPS) * p["gamma"] + p["beta"]
    return x


if __name__ == "__main__":
    batch, input_dim, hidden_size, layer_N = 8, 64, 128, 2
    use_orthogonal, use_ReLU = 1, 1

    key = jax.random.PRNGKey(0)
    kx, kp = jax.random.split(key)
    x = jax.random.normal(kx, (batch, input_dim), dtype=jnp.float32)

    # Exact-f32 path: tight check against the pure-JAX reference.
    model_f32 = MLPLayerPallas(input_dim, hidden_size, layer_N,
                               use_orthogonal, use_ReLU, key=kp,
                               matmul_dtype=jnp.float32)
    out_f32 = jax.block_until_ready(model_f32(x))
    ref_f32 = _ref_forward(model_f32.params, x, bool(use_ReLU), jnp.float32)
    assert out_f32.shape == (batch, hidden_size)
    assert jnp.allclose(out_f32, ref_f32, atol=1e-4, rtol=1e-4), \
        "f32 kernel mismatch vs JAX reference"

    # Default bf16-matmul path (perf): check against a bf16-matched reference.
    model_bf16 = MLPLayerPallas(input_dim, hidden_size, layer_N,
                                use_orthogonal, use_ReLU, key=kp,
                                matmul_dtype=jnp.bfloat16)
    out_bf16 = jax.block_until_ready(model_bf16(x))
    ref_bf16 = _ref_forward(model_bf16.params, x, bool(use_ReLU), jnp.bfloat16)
    assert out_bf16.shape == (batch, hidden_size)
    assert jnp.allclose(out_bf16, ref_bf16, atol=2e-2, rtol=2e-2), \
        "bf16 kernel mismatch vs JAX reference"

    print("KERNEL_OK")
</pallas_src>

<mosaic_0001>
module attributes {stable_mosaic.version = 11 : i64} {
  func.func @_mlp_fused_kernel(%arg0: i32, %arg1: i32, %arg2: memref<8x128xf32, #tpu.memory_space<vmem>>, %arg3: memref<1x128x128xf32, #tpu.memory_space<vmem>>, %arg4: memref<1x3x128xf32, #tpu.memory_space<vmem>>, %arg5: memref<8x128xf32, #tpu.memory_space<vmem>>, %arg6: memref<8x128xf32, #tpu.memory_space<vmem>>) attributes {dimension_semantics = [#tpu.dimension_semantics<parallel>, #tpu.dimension_semantics<arbitrary>], iteration_bounds = array<i64: 1, 3>, scalar_prefetch = 0 : i64, scratch_operands = 1 : i64, tpu.core_type = #tpu.core_type<tc>, window_params = [{transform_indices = @transform_0, window_bounds = array<i64: 8, 128>}, {transform_indices = @transform_1, window_bounds = array<i64: 1, 128, 128>}, {transform_indices = @transform_2, window_bounds = array<i64: 1, 3, 128>}, {transform_indices = @transform_3, window_bounds = array<i64: 8, 128>}]} {
    %c0_i32 = arith.constant 0 : i32
    %0 = arith.cmpi eq, %arg1, %c0_i32 : i32
    %1 = arith.extui %0 : i1 to i32
    %c0_i32_0 = arith.constant 0 : i32
    %2 = arith.cmpi ne, %1, %c0_i32_0 : i32
    scf.if %2 {
      %c0_21 = arith.constant 0 : index
      %c0_22 = arith.constant 0 : index
      %41 = vector.load %arg2[%c0_21, %c0_22] : memref<8x128xf32, #tpu.memory_space<vmem>>, vector<8x128xf32>
      %c0_23 = arith.constant 0 : index
      %c0_24 = arith.constant 0 : index
      %42 = vector.load %arg6[%c0_23, %c0_24] : memref<8x128xf32, #tpu.memory_space<vmem>>, vector<8x128xf32>
      tpu.vector_store %arg6[%c0_23, %c0_24], %41 {strides = array<i32>} : memref<8x128xf32, #tpu.memory_space<vmem>>, vector<8x128xf32>,
    } else {
    }
    %c0 = arith.constant 0 : index
    %c0_1 = arith.constant 0 : index
    %3 = vector.load %arg6[%c0, %c0_1] : memref<8x128xf32, #tpu.memory_space<vmem>>, vector<8x128xf32>
    %c0_2 = arith.constant 0 : index
    %c0_3 = arith.constant 0 : index
    %c0_4 = arith.constant 0 : index
    %4 = vector.load %arg3[%c0_2, %c0_3, %c0_4] : memref<1x128x128xf32, #tpu.memory_space<vmem>>, vector<1x128x128xf32>
    %5 = vector.shape_cast %4 : vector<1x128x128xf32> to vector<128x128xf32>
    %cst = arith.constant dense<0.000000e+00> : vector<8x128xf32>
    %6 = tpu.matmul %3, %5, %cst {dimension_numbers = #tpu.dot_dimension_numbers<[1], [0], [0], [1], [0, 0, 1, 1], [], []>} : vector<8x128xf32>, vector<128x128xf32>, vector<8x128xf32> -> vector<8x128xf32>
    %c0_5 = arith.constant 0 : index
    %c0_6 = arith.constant 0 : index
    %c0_7 = arith.constant 0 : index
    %7 = vector.load %arg4[%c0_5, %c0_6, %c0_7] : memref<1x3x128xf32, #tpu.memory_space<vmem>>, vector<1x1x128xf32>
    %8 = vector.shape_cast %7 : vector<1x1x128xf32> to vector<1x128xf32>
    %9 = vector.broadcast %8 : vector<1x128xf32> to vector<8x128xf32>
    %10 = arith.addf %6, %9 : vector<8x128xf32>
    %cst_8 = arith.constant 0.000000e+00 : f32
    %11 = vector.broadcast %cst_8 : f32 to vector<8x128xf32>
    %12 = arith.maximumf %10, %11 : vector<8x128xf32>
    %cst_9 = arith.constant dense<0.000000e+00> : vector<8xf32>
    %13 = vector.multi_reduction <add>, %12, %cst_9 [1] : vector<8x128xf32> to vector<8xf32>
    %14 = vector.shape_cast %13 : vector<8xf32> to vector<8x1xf32>
    %cst_10 = arith.constant 7.812500e-03 : f32
    %15 = vector.broadcast %cst_10 : f32 to vector<8x1xf32>
    %16 = arith.mulf %14, %15 : vector<8x1xf32>
    %17 = vector.broadcast %16 : vector<8x1xf32> to vector<8x128xf32>
    %18 = arith.subf %12, %17 : vector<8x128xf32>
    %19 = arith.mulf %18, %18 : vector<8x128xf32>
    %cst_11 = arith.constant dense<0.000000e+00> : vector<8xf32>
    %20 = vector.multi_reduction <add>, %19, %cst_11 [1] : vector<8x128xf32> to vector<8xf32>
    %21 = vector.shape_cast %20 : vector<8xf32> to vector<8x1xf32>
    %cst_12 = arith.constant 7.812500e-03 : f32
    %22 = vector.broadcast %cst_12 : f32 to vector<8x1xf32>
    %23 = arith.mulf %21, %22 : vector<8x1xf32>
    %cst_13 = arith.constant 9.99999974E-6 : f32
    %24 = vector.broadcast %cst_13 : f32 to vector<8x1xf32>
    %25 = arith.addf %23, %24 : vector<8x1xf32>
    %26 = math.rsqrt %25 : vector<8x1xf32>
    %27 = vector.broadcast %26 : vector<8x1xf32> to vector<8x128xf32>
    %28 = arith.mulf %18, %27 : vector<8x128xf32>
    %c0_14 = arith.constant 0 : index
    %c1 = arith.constant 1 : index
    %c0_15 = arith.constant 0 : index
    %29 = vector.load %arg4[%c0_14, %c1, %c0_15] : memref<1x3x128xf32, #tpu.memory_space<vmem>>, vector<1x1x128xf32>
    %30 = vector.shape_cast %29 : vector<1x1x128xf32> to vector<1x128xf32>
    %31 = vector.broadcast %30 : vector<1x128xf32> to vector<8x128xf32>
    %32 = arith.mulf %28, %31 : vector<8x128xf32>
    %c0_16 = arith.constant 0 : index
    %c2 = arith.constant 2 : index
    %c0_17 = arith.constant 0 : index
    %33 = vector.load %arg4[%c0_16, %c2, %c0_17] : memref<1x3x128xf32, #tpu.memory_space<vmem>>, vector<1x1x128xf32>
    %34 = vector.shape_cast %33 : vector<1x1x128xf32> to vector<1x128xf32>
    %35 = vector.broadcast %34 : vector<1x128xf32> to vector<8x128xf32>
    %36 = arith.addf %32, %35 : vector<8x128xf32>
    %c0_18 = arith.constant 0 : index
    %c0_19 = arith.constant 0 : index
    %37 = vector.load %arg6[%c0_18, %c0_19] : memref<8x128xf32, #tpu.memory_space<vmem>>, vector<8x128xf32>
    tpu.vector_store %arg6[%c0_18, %c0_19], %36 {strides = array<i32>} : memref<8x128xf32, #tpu.memory_space<vmem>>, vector<8x128xf32>,
    %c2_i32 = arith.constant 2 : i32
    %38 = arith.cmpi eq, %arg1, %c2_i32 : i32
    %39 = arith.extui %38 : i1 to i32
    %c0_i32_20 = arith.constant 0 : i32
    %40 = arith.cmpi ne, %39, %c0_i32_20 : i32
    scf.if %40 {
      %c0_21 = arith.constant 0 : index
      %c0_22 = arith.constant 0 : index
      %41 = vector.load %arg5[%c0_21, %c0_22] : memref<8x128xf32, #tpu.memory_space<vmem>>, vector<8x128xf32>
      tpu.vector_store %arg5[%c0_21, %c0_22], %36 {strides = array<i32>} : memref<8x128xf32, #tpu.memory_space<vmem>>, vector<8x128xf32>,
    } else {
    }
    return
  }
  func.func @transform_0(%arg0: i32, %arg1: i32) -> (i32, i32) {
    %c0_i32 = arith.constant 0 : i32
    %c0_i32_0 = arith.constant 0 : i32
    return %arg0, %c0_i32 : i32, i32
  }
  func.func @transform_1(%arg0: i32, %arg1: i32) -> (i32, i32, i32) {
    %c0_i32 = arith.constant 0 : i32
    %c0_i32_0 = arith.constant 0 : i32
    %c0_i32_1 = arith.constant 0 : i32
    return %arg1, %c0_i32, %c0_i32_0 : i32, i32, i32
  }
  func.func @transform_2(%arg0: i32, %arg1: i32) -> (i32, i32, i32) {
    %c0_i32 = arith.constant 0 : i32
    %c0_i32_0 = arith.constant 0 : i32
    %c0_i32_1 = arith.constant 0 : i32
    return %arg1, %c0_i32, %c0_i32_0 : i32, i32, i32
  }
  func.func @transform_3(%arg0: i32, %arg1: i32) -> (i32, i32) {
    %c0_i32 = arith.constant 0 : i32
    %c0_i32_0 = arith.constant 0 : i32
    return %arg0, %c0_i32 : i32, i32
  }
}

</mosaic_0001>

<llo_original>
// kernel: tpu_custom_call.1
$region0: #{tpu_custom_call.1}
  #allocation0 [shape = 'u32[]', space=smem, size = 0x4, offset = 0x4, fixed_abs, tag = 'smem constant byte address 0x4 - core index']
  #allocation1 [shape = 'u32[72,128]{1,0:T(1,128)}', space=vmem, size = 0x9000, scoped, tag = 'internal scratch']
  #allocation2 [shape = 'f32[8,128]{1,0:T(8,128)}', space=vmem, size = 0x1000, scoped, tag = 'scratch operand']
  %s0 = inlined_call_operand.hbm [shape: f32[8,128], index: 0, kind: input, shape index: {}]
  %s1 = inlined_call_operand.hbm [shape: f32[3,128,128], index: 1, kind: input, shape index: {}]
  %s2 = inlined_call_operand.hbm [shape: f32[3,3,128], index: 2, kind: input, shape index: {}]
  %s3 = inlined_call_operand.hbm [shape: f32[8,128], index: 3, kind: output, shape index: {}]
  %s4 = sld [smem:[#allocation0]]
  $region65: #{tpu_custom_call.1} parent=0
    _
  %s6 = ssub.s32 1, %s4
  %s7 = scalar_select 0, %s6, %s4
  $region1: #{tpu_custom_call.1} parent=0
    #allocation3 [shape = 'u8[4096]{0}', space=vmem, size = 0x1000, scoped, tag = 'input window, operand 0, single buffered']
    #allocation4 [shape = 's32[2]{0}', space=sflag, size = 0x8, scoped, tag = 'scoped memory for tpu_custom_call.1']
    #allocation5 [shape = 's32[2]{0}', space=sflag, size = 0x8, scoped, tag = 'scoped memory for tpu_custom_call.1']
    #allocation6 [shape = 'u8[131072]{0}', space=vmem, size = 0x20000, scoped, tag = 'input window, operand 1']
    #allocation7 [shape = 's32[2]{0}', space=sflag, size = 0x8, scoped, tag = 'scoped memory for tpu_custom_call.1']
    #allocation8 [shape = 'u8[4096]{0}', space=vmem, size = 0x1000, scoped, tag = 'input window, operand 2']
    #allocation9 [shape = 'u8[4096]{0}', space=vmem, size = 0x1000, scoped, tag = 'output window, operand 0, single buffered']
    %8 = vsyncpa [#allocation4], 0
    %9 = vsyncpa [#allocation7], 0
    %s10 = scalar_lea.sflag [#allocation7], 1
    %11 = vsyncpa %s10, 0
    %12 = vsyncpa [#allocation5], 0
    loop: start=0, step=1, limit=5
    $region2: #{tpu_custom_call.1} parent=1 // loop_pre_header
      _
    $region3: #{tpu_custom_call.1} parent=1 // loop_header
      %s14 = sphi 0, %s18
      %p15 = scmp.ge.s32.totalorder %s14, 5
      %s21 = sphi 0, %s33
      %s22 = sphi 0, %s29
      %s23 = sphi 0, %s21
      %s24 = sphi 0, %s22
      %s25 = sphi 0, %s23
      %s26 = sphi 0, %s24
      %s36 = sphi 0, %s38
      %s39 = sphi 0, %s36
      %s40 = sphi 0, %s39
      %s56 = sphi 0, %s40
      %s62 = sphi 0, %s64
      %s65 = sphi 0, %s62
      %s66 = sphi 0, %s65
      %s82 = sphi 0, %s66
      %s88 = sphi 0, %s90
      %s91 = sphi 0, %s88
      %s92 = sphi 0, %s91
      %s108 = sphi 0, %s92
      %s114 = sphi 0, %s116
      %s117 = sphi 0, %s114
      %s118 = sphi 0, %s117
      %s134 = sphi 0, %s118
    $region4: #{tpu_custom_call.1} parent=1 // loop_header_branch
      %17 = sbr.rel (%p15) target = $region8
    $region5: #{tpu_custom_call.1} parent=1 // loop_body
      %s19 = ssub.s32 %s14, 1
      %s20 = ssub.s32 %s14, 2
      %s27 = sadd.s32 1, %s22
      %p28 = scmp.ge.s32.totalorder %s27, 3
      %s29 = scalar_select %p28, 0, %s27
      %s30 = sadd.s32 1, %s21
      %s31 = scalar_select %p28, %s30, %s21
      %p32 = scmp.ge.s32.totalorder %s31, 1
      %s33 = scalar_select %p32, 0, %s31
      %s34 = ssub.s32 %s21, %s33
      %p35 = scmp.eq.s32.totalorder %s34, 0
      %s37 = sadd.s32 %s36, 1
      %s38 = scalar_select %p35, %s36, %s37
      %p41 = pneg %p35
      %p42 = scmp.eq.s32.totalorder %s14, 2
      %p43 = por %p41, %p42
      %p44 = scmp.ne.s32.totalorder %s36, %s39
      %p45 = scmp.eq.s32.totalorder %s14, 0
      %p46 = por %p44, %p45
      %p47 = scmp.ne.s32.totalorder %s36, %s39
      %p48 = scmp.eq.s32.totalorder %s19, 2
      %p49 = por %p47, %p48
      %p50 = scmp.ne.s32.totalorder %s39, %s40
      %p51 = scmp.eq.s32.totalorder %s19, 0
      %p52 = por %p50, %p51
      %p53 = scmp.ne.s32.totalorder %s39, %s40
      %p54 = scmp.eq.s32.totalorder %s20, 2
      %p55 = por %p53, %p54
      %p57 = scmp.ne.s32.totalorder %s40, %s56
      %p58 = scmp.eq.s32.totalorder %s20, 0
      %p59 = por %p57, %p58
      %s60 = ssub.s32 %s22, %s29
      %p61 = scmp.eq.s32.totalorder %s60, 0
      %s63 = sadd.s32 %s62, 1
      %s64 = scalar_select %p61, %s62, %s63
      %p67 = pneg %p61
      %p68 = scmp.eq.s32.totalorder %s14, 2
      %p69 = por %p67, %p68
      %p70 = scmp.ne.s32.totalorder %s62, %s65
      %p71 = scmp.eq.s32.totalorder %s14, 0
      %p72 = por %p70, %p71
      %p73 = scmp.ne.s32.totalorder %s62, %s65
      %p74 = scmp.eq.s32.totalorder %s19, 2
      %p75 = por %p73, %p74
      %p76 = scmp.ne.s32.totalorder %s65, %s66
      %p77 = scmp.eq.s32.totalorder %s19, 0
      %p78 = por %p76, %p77
      %p79 = scmp.ne.s32.totalorder %s65, %s66
      %p80 = scmp.eq.s32.totalorder %s20, 2
      %p81 = por %p79, %p80
      %p83 = scmp.ne.s32.totalorder %s66, %s82
      %p84 = scmp.eq.s32.totalorder %s20, 0
      %p85 = por %p83, %p84
      %s86 = ssub.s32 %s22, %s29
      %p87 = scmp.eq.s32.totalorder %s86, 0
      %s89 = sadd.s32 %s88, 1
      %s90 = scalar_select %p87, %s88, %s89
      %p93 = pneg %p87
      %p94 = scmp.eq.s32.totalorder %s14, 2
      %p95 = por %p93, %p94
      %p96 = scmp.ne.s32.totalorder %s88, %s91
      %p97 = scmp.eq.s32.totalorder %s14, 0
      %p98 = por %p96, %p97
      %p99 = scmp.ne.s32.totalorder %s88, %s91
      %p100 = scmp.eq.s32.totalorder %s19, 2
      %p101 = por %p99, %p100
      %p102 = scmp.ne.s32.totalorder %s91, %s92
      %p103 = scmp.eq.s32.totalorder %s19, 0
      %p104 = por %p102, %p103
      %p105 = scmp.ne.s32.totalorder %s91, %s92
      %p106 = scmp.eq.s32.totalorder %s20, 2
      %p107 = por %p105, %p106
      %p109 = scmp.ne.s32.totalorder %s92, %s108
      %p110 = scmp.eq.s32.totalorder %s20, 0
      %p111 = por %p109, %p110
      %s112 = ssub.s32 %s21, %s33
      %p113 = scmp.eq.s32.totalorder %s112, 0
      %s115 = sadd.s32 %s114, 1
      %s116 = scalar_select %p113, %s114, %s115
      %p119 = pneg %p113
      %p120 = scmp.eq.s32.totalorder %s14, 2
      %p121 = por %p119, %p120
      %p122 = scmp.ne.s32.totalorder %s114, %s117
      %p123 = scmp.eq.s32.totalorder %s14, 0
      %p124 = por %p122, %p123
      %p125 = scmp.ne.s32.totalorder %s114, %s117
      %p126 = scmp.eq.s32.totalorder %s19, 2
      %p127 = por %p125, %p126
      %p128 = scmp.ne.s32.totalorder %s117, %s118
      %p129 = scmp.eq.s32.totalorder %s19, 0
      %p130 = por %p128, %p129
      %p131 = scmp.ne.s32.totalorder %s117, %s118
      %p132 = scmp.eq.s32.totalorder %s20, 2
      %p133 = por %p131, %p132
      %p135 = scmp.ne.s32.totalorder %s118, %s134
      %p136 = scmp.eq.s32.totalorder %s20, 0
      %p137 = por %p135, %p136
      %p138 = scmp.le.s32.totalorder 1, %s14
      %p139 = scmp.lt.s32.totalorder %s14, 4
      %p140 = pnand %p138, %p139
      %p141 = pneg %p140
      // Predicated region
      $region9: #{tpu_custom_call.1} parent=5 // pred_check
        _
      $region10: #{tpu_custom_call.1} parent=5 // pred_check_branch
        %143 = sbr.rel (%p140) target = $region12
      $region11: #{tpu_custom_call.1} parent=5 // pred_region
        %s144 = ssub.s32 %s14, 1
        // Predicated region
        $region13: #{tpu_custom_call.1} parent=11 // pred_check
          %p145 = pneg %p52
        $region14: #{tpu_custom_call.1} parent=11 // pred_check_branch
          %147 = sbr.rel (%p145) target = $region16
        $region15: #{tpu_custom_call.1} parent=11 // pred_region
          %149 = vsyncadd [#allocation4], 0
          %s150 = smul.addr %s23, 8
          %s151 = scalar_lea.hbm %s0, %s150
          %s153 = sshll.u32 %s151, 4
          %s154 = int_to_ptr.hbm [resolvable:$true] %s153
          %s155 = sshll.u32 [#allocation3], 4
          %s156 = int_to_ptr.vmem [resolvable:$true] %s155
          %158 = dma.hbm_to_vmem [thread:$0]  %s154, 128, %s156, [#allocation4]
        $region16: #{tpu_custom_call.1} parent=11 // pred_fallthru
          _
      $region12: #{tpu_custom_call.1} parent=5 // pred_fallthru
        _
      %p159 = scmp.lt.s32.totalorder %s14, 3
      // Predicated region
      $region17: #{tpu_custom_call.1} parent=5 // pred_check
        %p160 = pneg %p159
      $region18: #{tpu_custom_call.1} parent=5 // pred_check_branch
        %162 = sbr.rel (%p160) target = $region20
      $region19: #{tpu_custom_call.1} parent=5 // pred_region
        // Predicated region
        $region21: #{tpu_custom_call.1} parent=19 // pred_check
          %p163 = pneg %p72
        $region22: #{tpu_custom_call.1} parent=19 // pred_check_branch
          %165 = sbr.rel (%p163) target = $region24
        $region23: #{tpu_custom_call.1} parent=19 // pred_region
          %s166 = sand.u32 %s14, 1
          %s167 = scalar_lea.sflag [#allocation7], %s166
          %s168 = sand.u32 %s62, 1
          %s169 = smul.addr %s168, 128
          %s170 = scalar_lea.vmem [#allocation6], %s169
          %172 = vsyncadd %s167, 0
          %s173 = smul.addr %s22, 16
          %s174 = smul.addr %s173, 8
          %s175 = scalar_lea.hbm %s1, %s174
          %s176 = sshll.u32 %s175, 4
          %s177 = int_to_ptr.hbm [resolvable:$true] %s176
          %s178 = sshll.u32 %s170, 4
          %s179 = int_to_ptr.vmem [resolvable:$true] %s178
          %184 = dma.hbm_to_vmem [thread:$0]  %s177, 2048, %s179, %s167, 128, 128, 8
        $region24: #{tpu_custom_call.1} parent=19 // pred_fallthru
          _
        // Predicated region
        $region25: #{tpu_custom_call.1} parent=19 // pred_check
          %p185 = pneg %p98
        $region26: #{tpu_custom_call.1} parent=19 // pred_check_branch
          %187 = sbr.rel (%p185) target = $region28
        $region27: #{tpu_custom_call.1} parent=19 // pred_region
          %s188 = sand.u32 %s14, 1
          %s189 = scalar_lea.sflag [#allocation7], %s188
          %s190 = sand.u32 %s88, 1
          %s191 = smul.addr %s190, 4
          %s192 = scalar_lea.vmem [#allocation8], %s191
          %194 = vsyncadd %s189, 0
          %s195 = smul.addr %s22, 4
          %s196 = scalar_lea.hbm %s2, %s195
          %s198 = sshll.u32 %s196, 4
          %s199 = int_to_ptr.hbm [resolvable:$true] %s198
          %s200 = sshll.u32 %s192, 4
          %s201 = int_to_ptr.vmem [resolvable:$true] %s200
          %203 = dma.hbm_to_vmem [thread:$0]  %s199, 64, %s201, %s189
        $region28: #{tpu_custom_call.1} parent=19 // pred_fallthru
          _
      $region20: #{tpu_custom_call.1} parent=5 // pred_fallthru
        _
      %p204 = scmp.le.s32.totalorder 1, %s14
      %p205 = scmp.lt.s32.totalorder %s14, 4
      %p206 = pnand %p204, %p205
      %p207 = pneg %p206
      // Predicated region
      $region29: #{tpu_custom_call.1} parent=5 // pred_check
        _
      $region30: #{tpu_custom_call.1} parent=5 // pred_check_branch
        %209 = sbr.rel (%p206) target = $region32
      $region31: #{tpu_custom_call.1} parent=5 // pred_region
        %s210 = ssub.s32 %s14, 1
        // Predicated region
        $region33: #{tpu_custom_call.1} parent=31 // pred_check
          %p211 = pneg %p52
        $region34: #{tpu_custom_call.1} parent=31 // pred_check_branch
          %213 = sbr.rel (%p211) target = $region36
        $region35: #{tpu_custom_call.1} parent=31 // pred_region
          %215 = dma.done [#allocation4], 128
        $region36: #{tpu_custom_call.1} parent=31 // pred_fallthru
          _
        %s216 = sand.u32 %s19, 1
        %s217 = scalar_lea.sflag [#allocation7], %s216
        %s218 = sand.u32 %s65, 1
        %s219 = smul.addr %s218, 128
        %s220 = scalar_lea.vmem [#allocation6], %s219
        // Predicated region
        $region37: #{tpu_custom_call.1} parent=31 // pred_check
          %p221 = pneg %p78
        $region38: #{tpu_custom_call.1} parent=31 // pred_check_branch
          %223 = sbr.rel (%p221) target = $region40
        $region39: #{tpu_custom_call.1} parent=31 // pred_region
          %225 = dma.done %s217, 2048
        $region40: #{tpu_custom_call.1} parent=31 // pred_fallthru
          _
        %s226 = sand.u32 %s19, 1
        %s227 = scalar_lea.sflag [#allocation7], %s226
        %s228 = sand.u32 %s91, 1
        %s229 = smul.addr %s228, 4
        %s230 = scalar_lea.vmem [#allocation8], %s229
        // Predicated region
        $region41: #{tpu_custom_call.1} parent=31 // pred_check
          %p231 = pneg %p104
        $region42: #{tpu_custom_call.1} parent=31 // pred_check_branch
          %233 = sbr.rel (%p231) target = $region44
        $region43: #{tpu_custom_call.1} parent=31 // pred_region
          %235 = dma.done %s227, 64
        $region44: #{tpu_custom_call.1} parent=31 // pred_fallthru
          _
        %p236 = pneg %p52
        %p237 = pneg %p49
        %s238 = sand.u32 %s19, 1
        %s239 = scalar_lea.sflag [#allocation7], %s238
        %s240 = sand.u32 %s65, 1
        %s241 = smul.addr %s240, 128
        %s242 = scalar_lea.vmem [#allocation6], %s241
        %p243 = pneg %p78
        %p244 = pneg %p75
        %s245 = sand.u32 %s19, 1
        %s246 = scalar_lea.sflag [#allocation7], %s245
        %s247 = sand.u32 %s91, 1
        %s248 = smul.addr %s247, 4
        %s249 = scalar_lea.vmem [#allocation8], %s248
        %p250 = pneg %p104
        %p251 = pneg %p101
        %p252 = pneg %p130
        %p253 = pneg %p127
        %p254 = scmp.eq.s32.totalorder %s24, 0
        // Predicated region
        $region45: #{tpu_custom_call.1} parent=31 // pred_check
          %p255 = pneg %p254
        $region46: #{tpu_custom_call.1} parent=31 // pred_check_branch
          %257 = sbr.rel (%p255) target = $region48
        $region47: #{tpu_custom_call.1} parent=31 // pred_region
          %v258 = vld [vmem:[#allocation3] sm:$0xff]
          %259 = vst [vmem:[#allocation2] sm:$0xff] %v258
        $region48: #{tpu_custom_call.1} parent=31 // pred_fallthru
          _
        %v260 = vld [vmem:[#allocation2] sm:$0xff]
        %v261 = vld [vmem:[%s220] sm:$0xff]
        %v262 = vld [vmem:[%s220 + $0x8] sm:$0xff]
        %v263 = vld [vmem:[%s220 + $0x10] sm:$0xff]
        %v264 = vld [vmem:[%s220 + $0x18] sm:$0xff]
        %v265 = vld [vmem:[%s220 + $0x20] sm:$0xff]
        %v266 = vld [vmem:[%s220 + $0x28] sm:$0xff]
        %v267 = vld [vmem:[%s220 + $0x30] sm:$0xff]
        %v268 = vld [vmem:[%s220 + $0x38] sm:$0xff]
        %v269 = vld [vmem:[%s220 + $0x40] sm:$0xff]
        %v270 = vld [vmem:[%s220 + $0x48] sm:$0xff]
        %v271 = vld [vmem:[%s220 + $0x50] sm:$0xff]
        %v272 = vld [vmem:[%s220 + $0x58] sm:$0xff]
        %v273 = vld [vmem:[%s220 + $0x60] sm:$0xff]
        %v274 = vld [vmem:[%s220 + $0x68] sm:$0xff]
        %v275 = vld [vmem:[%s220 + $0x70] sm:$0xff]
        %v276 = vld [vmem:[%s220 + $0x78] sm:$0xff]
        %v277 = vld [vmem:[%s230] sm:$0x1]
        %v278 = vperm.slane %v277, 0
        %279 = vmatpush.msra.mxu0 %v276
        %280 = vmatpush.msra.mxu0 %v275
        %281 = vmatpush.msra.mxu0 %v274
        %282 = vmatpush.msra.mxu0 %v273
        %283 = vmatpush.msra.mxu0 %v272
        %284 = vmatpush.msra.mxu0 %v271
        %285 = vmatpush.msra.mxu0 %v270
        %286 = vmatpush.msra.mxu0 %v269
        %287 = vmatpush.msra.mxu0 %v268
        %288 = vmatpush.msra.mxu0 %v267
        %289 = vmatpush.msra.mxu0 %v266
        %290 = vmatpush.msra.mxu0 %v265
        %291 = vmatpush.msra.mxu0 %v264
        %292 = vmatpush.msra.mxu0 %v263
        %293 = vmatpush.msra.mxu0 %v262
        %294 = vmatpush.msra.mxu0 %v261
        %295 = vmatmul.f32.gmra.mxu0 %v260
        %v296 = vpop.f32.mrf.mxu0
        %v297 = vadd.f32 %v278, %v296
        %298 = vdwg.mxu0
        %v299 = vmax.f32 %v297, 0.0
        %300 = vadd.xlane.f32.xlu0 %v299
        %v301 = vpop.xlane.xlu0 %300
        %v302 = vmul.f32 %v301, 0.0078125
        %v303 = vsub.f32 %v299, %v302
        %v304 = vmul.f32 %v303, %v303
        %305 = vadd.xlane.f32.xlu0 %v304
        %v306 = vpop.xlane.xlu0 %305
        %v307 = vmul.f32 %v306, 0.0078125
        %v308 = vadd.f32 %v307, 1e-05
        %v309 = vrsqrt.pop %v308
        %v310 = vmul.f32 %v309, %v308
        %v311 = vmul.f32 %v310, %v309
        %v312 = vmul.f32 0.5, %v311
        %v313 = vsub.f32 1.5, %v312
        %v314 = vmul.f32 %v309, %v313
        %vm315 = vweird.f32 %v308
        %vm316 = vweird.f32 %v309
        %vm317 = vmor %vm315, %vm316
        %v318 = vsel %vm317, %v309, %v314
        %v319 = vmul.f32 %v303, %v318
        %v320 = vld [vmem:[%s230 + $0x1] sm:$0x1]
        %v321 = vperm.slane %v320, 0
        %v322 = vmul.f32 %v319, %v321
        %v323 = vld [vmem:[%s230 + $0x2] sm:$0x1]
        %v324 = vperm.slane %v323, 0
        %v325 = vadd.f32 %v322, %v324
        %326 = vst [vmem:[#allocation2] sm:$0xff] %v325
        %p327 = scmp.eq.s32.totalorder %s24, 2
        // Predicated region
        $region49: #{tpu_custom_call.1} parent=31 // pred_check
          %p328 = pneg %p327
        $region50: #{tpu_custom_call.1} parent=31 // pred_check_branch
          %330 = sbr.rel (%p328) target = $region52
        $region51: #{tpu_custom_call.1} parent=31 // pred_region
          %331 = vst [vmem:[#allocation9] sm:$0xff] %v325
        $region52: #{tpu_custom_call.1} parent=31 // pred_fallthru
          _
        // Predicated region
        $region53: #{tpu_custom_call.1} parent=31 // pred_check
          %p332 = pneg %p127
        $region54: #{tpu_custom_call.1} parent=31 // pred_check_branch
          %334 = sbr.rel (%p332) target = $region56
        $region55: #{tpu_custom_call.1} parent=31 // pred_region
          %336 = vsyncadd [#allocation5], 0
          %s337 = smul.addr %s23, 8
          %s338 = scalar_lea.hbm %s3, %s337
          %s340 = sshll.u32 [#allocation9], 4
          %s341 = int_to_ptr.vmem [resolvable:$true] %s340
          %s342 = sshll.u32 %s338, 4
          %s343 = int_to_ptr.hbm [resolvable:$true] %s342
          %345 = dma.vmem_to_hbm [thread:$0]  %s341, 128, %s343, [#allocation5]
        $region56: #{tpu_custom_call.1} parent=31 // pred_fallthru
          _
        // Predicated region
        $region57: #{tpu_custom_call.1} parent=31 // pred_check
          %p346 = pneg %p127
        $region58: #{tpu_custom_call.1} parent=31 // pred_check_branch
          %348 = sbr.rel (%p346) target = $region60
        $region59: #{tpu_custom_call.1} parent=31 // pred_region
          %350 = dma.done [#allocation5], 128
        $region60: #{tpu_custom_call.1} parent=31 // pred_fallthru
          _
      $region32: #{tpu_custom_call.1} parent=5 // pred_fallthru
        _
      %p351 = scmp.le.s32.totalorder 2, %s14
      // Predicated region
      $region61: #{tpu_custom_call.1} parent=5 // pred_check
        %p352 = pneg %p351
      $region62: #{tpu_custom_call.1} parent=5 // pred_check_branch
        %354 = sbr.rel (%p352) target = $region64
      $region63: #{tpu_custom_call.1} parent=5 // pred_region
        %s355 = ssub.s32 %s14, 2
      $region64: #{tpu_custom_call.1} parent=5 // pred_fallthru
        _
    $region6: #{tpu_custom_call.1} parent=1 // loop_footer
      %s18 = sadd.s32 1, %s14
    $region7: #{tpu_custom_call.1} parent=1 // loop_footer_branch
      %13 = sbr.rel target = $region3
    $region8: #{tpu_custom_call.1} parent=1 // loop_exit
      _
    %356 = vsyncpa [#allocation4], 1
    %s357 = scalar_lea.sflag [#allocation4], 1
    %358 = vsyncpa %s357, 1
    %359 = vsyncpa [#allocation7], 1
    %s360 = scalar_lea.sflag [#allocation7], 1
    %361 = vsyncpa %s360, 1
    %362 = vsyncpa [#allocation5], 1
    %s363 = scalar_lea.sflag [#allocation5], 1
    %364 = vsyncpa %s363, 1

</llo_original>
